<compile_context>
chip_gen: v7x
topology: tpu7x:2x2x1
jax: 0.10.0
libtpu: 0.0.40
codegen_flags: <defaults>
</compile_context>

<pallas_src>
import jax
import jax.numpy as jnp
from jax.experimental import pallas as pl
from jax.experimental.pallas import tpu as pltpu

D_IN = 784            # 28*28 flattened MNIST
HIDDEN = 128
LATENT = 32


def _round_up(x, m):
    return ((x + m - 1) // m) * m


# --------------------------------------------------------------------------
# Kernel: 3 MXU matmuls (784->128, 128->128 fused latent, 128->784) + ReLUs.
# --------------------------------------------------------------------------
def autoencoder_kernel(x_ref,
                       w1_ref, b1_ref,
                       w23_ref, b23_ref,
                       w4_ref, b4_ref,
                       out_ref):
    # ---- encoder layer 1 ----
    x = x_ref[...].astype(jnp.bfloat16)        # no-op when x is already bf16
    h1 = jnp.dot(x, w1_ref[...], preferred_element_type=jnp.float32) + b1_ref[...]
    h1 = jnp.maximum(h1, 0.0)                  # ReLU

    # ---- fused encoder-2 / decoder-1 (no nonlinearity on the latent) ----
    h2 = jnp.dot(h1.astype(jnp.bfloat16), w23_ref[...],
                 preferred_element_type=jnp.float32) + b23_ref[...]
    h2 = jnp.maximum(h2, 0.0)                  # ReLU

    # ---- decoder layer 2 ----
    rec = jnp.dot(h2.astype(jnp.bfloat16), w4_ref[...],
                  preferred_element_type=jnp.float32) + b4_ref[...]
    out_ref[...] = rec.astype(out_ref.dtype)


# --------------------------------------------------------------------------
# Parameter preparation: fuse latent matmuls, store weights in bf16
# (biases kept f32 -- negligible bytes, added post-accumulation).
# --------------------------------------------------------------------------
def prepare_params(p):
    # NOTE: exact only because the exercise model applies no activation to the
    # latent code (Linear -> ReLU -> Linear / Linear -> ReLU -> Linear).
    w23 = p["w2"] @ p["w3"]                     # [HIDDEN, HIDDEN]
    b23 = p["b2"] @ p["w3"] + p["b3"]           # [1, HIDDEN]
    return dict(
        w1=p["w1"].astype(jnp.bfloat16),        # [D_IN, HIDDEN]
        b1=p["b1"].astype(jnp.float32),         # [1, HIDDEN]
        w23=w23.astype(jnp.bfloat16),           # [HIDDEN, HIDDEN]
        b23=b23.astype(jnp.float32),            # [1, HIDDEN]
        w4=p["w4"].astype(jnp.bfloat16),        # [HIDDEN, D_IN]
        b4=p["b4"].astype(jnp.float32),         # [1, D_IN]
    )


# --------------------------------------------------------------------------
# Wrapper: batch-gridded pallas_call with VMEM-resident weights.
# --------------------------------------------------------------------------
def _choose_batch_tile(B, max_tile):
    """Pick (TB, B_pad): minimize batch padding, amortize per-step overhead,
    and keep >= 2 grid steps (for v7x's 2 TensorCores) when B allows."""
    n_steps = max(pl.cdiv(B, max_tile), min(2, pl.cdiv(B, 8)))
    TB = _round_up(pl.cdiv(B, n_steps), 8)
    B_pad = _round_up(B, TB)
    return TB, B_pad


def autoencoder_forward(x, prep, *, max_tile=1024):
    """x: [B, 784] flattened images (bf16 preferred, f32 accepted);
    prep: output of prepare_params.  Returns [B, 784] in x.dtype."""
    B, D = x.shape
    assert D == D_IN, f"expected flattened 28x28 input, got {D}"

    TB, B_pad = _choose_batch_tile(B, max_tile)

    # Small batch-tail pad only when B % TB != 0 (feature dim is untouched).
    x_in = x if B_pad == B else jnp.zeros((B_pad, D_IN), x.dtype).at[:B].set(x)

    def full(shape):
        # Weights/biases: one full-array block with a constant block index ->
        # DMA'd once, then VMEM-resident across the batch loop.
        return pl.BlockSpec(shape, lambda i: (0, 0))

    out = pl.pallas_call(
        autoencoder_kernel,
        out_shape=jax.ShapeDtypeStruct((B_pad, D_IN), x.dtype),
        grid=(B_pad // TB,),
        in_specs=[
            # Last block dim == full array dim (784), so no 128-alignment pad.
            pl.BlockSpec((TB, D_IN), lambda i: (i, 0)),        # x tile
            full((D_IN, HIDDEN)), full((1, HIDDEN)),           # w1, b1
            full((HIDDEN, HIDDEN)), full((1, HIDDEN)),         # W23, b23
            full((HIDDEN, D_IN)), full((1, D_IN)),             # w4, b4
        ],
        out_specs=pl.BlockSpec((TB, D_IN), lambda i: (i, 0)),
        compiler_params=pltpu.CompilerParams(
            dimension_semantics=("parallel",),     # megacore split on v7x
            vmem_limit_bytes=32 * 1024 * 1024,     # v5e default is only 16 MiB
        ),
    )(x_in,
      prep["w1"], prep["b1"],
      prep["w23"], prep["b23"],
      prep["w4"], prep["b4"])

    return out if B_pad == B else out[:B]


# --------------------------------------------------------------------------
# References
# --------------------------------------------------------------------------
def reference_forward_f32(x, p):
    """Original f32, unfused semantics (matches the PyTorch module)."""
    h1 = jnp.maximum(x @ p["w1"] + p["b1"], 0.0)
    z = h1 @ p["w2"] + p["b2"]
    h2 = jnp.maximum(z @ p["w3"] + p["b3"], 0.0)
    return h2 @ p["w4"] + p["b4"]


def reference_forward_prepared(x_bf16, prep):
    """Same arithmetic as the kernel (bf16 weights/activations, fused latent,
    f32 accumulation, bf16 writeback)."""
    h1 = jnp.maximum(
        jnp.dot(x_bf16.astype(jnp.bfloat16), prep["w1"],
                preferred_element_type=jnp.float32) + prep["b1"], 0.0)
    h2 = jnp.maximum(
        jnp.dot(h1.astype(jnp.bfloat16), prep["w23"],
                preferred_element_type=jnp.float32) + prep["b23"], 0.0)
    rec = jnp.dot(h2.astype(jnp.bfloat16), prep["w4"],
                  preferred_element_type=jnp.float32) + prep["b4"]
    return rec.astype(x_bf16.dtype)


def init_params(key, d_in=D_IN, hidden=HIDDEN, latent=LATENT, dtype=jnp.float32):
    """PyTorch nn.Linear-style init (U[-1/sqrt(fan_in), 1/sqrt(fan_in)]).
    Weights stored as [in_features, out_features]; biases as [1, out_features]."""
    def linear(key, fan_in, fan_out):
        kw, kb = jax.random.split(key)
        bound = 1.0 / jnp.sqrt(fan_in)
        w = jax.random.uniform(kw, (fan_in, fan_out), dtype, -bound, bound)
        b = jax.random.uniform(kb, (1, fan_out), dtype, -bound, bound)
        return w, b

    k1, k2, k3, k4 = jax.random.split(key, 4)
    w1, b1 = linear(k1, d_in, hidden)     # encoder layer 1
    w2, b2 = linear(k2, hidden, latent)   # encoder layer 2 (-> latent)
    w3, b3 = linear(k3, latent, hidden)   # decoder layer 1
    w4, b4 = linear(k4, hidden, d_in)     # decoder layer 2 (-> reconstruction)
    return dict(w1=w1, b1=b1, w2=w2, b2=b2, w3=w3, b3=b3, w4=w4, b4=b4)


if __name__ == "__main__":
    key = jax.random.PRNGKey(0)
    k_params, k_x = jax.random.split(key)

    params = init_params(k_params)
    prep = prepare_params(params)

    # ---- case 1: small demo batch (single grid step) ----
    B = 8
    x_f32 = jax.random.uniform(k_x, (B, D_IN), jnp.float32)
    # Pre-materialize the "dataset" in the streaming layout/dtype once,
    # outside the hot path (per review: halve both DMA streams).
    x_bf16 = x_f32.astype(jnp.bfloat16)

    out = autoencoder_forward(x_bf16, prep)
    out = jax.block_until_ready(out)
    assert out.shape == (B, D_IN)
    assert out.dtype == jnp.bfloat16

    out_f32 = out.astype(jnp.float32)
    ref_prep = reference_forward_prepared(x_bf16, prep).astype(jnp.float32)
    assert jnp.allclose(out_f32, ref_prep, atol=1e-2, rtol=1e-2), \
        "mismatch vs prepared-params reference"
    ref_f32 = reference_forward_f32(x_f32, params)
    assert jnp.allclose(out_f32, ref_f32, atol=5e-2, rtol=5e-2), \
        "mismatch vs f32 module semantics"

    # ---- case 2: exercise multi-step grid + batch-tail padding ----
    B2 = 20
    x2_f32 = jax.random.uniform(jax.random.fold_in(k_x, 1), (B2, D_IN), jnp.float32)
    x2_bf16 = x2_f32.astype(jnp.bfloat16)
    out2 = jax.block_until_ready(autoencoder_forward(x2_bf16, prep))
    assert out2.shape == (B2, D_IN)
    ref2 = reference_forward_prepared(x2_bf16, prep).astype(jnp.float32)
    assert jnp.allclose(out2.astype(jnp.float32), ref2, atol=1e-2, rtol=1e-2), \
        "mismatch vs prepared-params reference (gridded batch)"

    print("KERNEL_OK")
</pallas_src>

<mosaic_0001>
module attributes {stable_mosaic.version = 11 : i64} {
  func.func @autoencoder_kernel(%arg0: i32, %arg1: memref<8x784xbf16, #tpu.memory_space<vmem>>, %arg2: memref<784x128xbf16, #tpu.memory_space<vmem>>, %arg3: memref<1x128xf32, #tpu.memory_space<vmem>>, %arg4: memref<128x128xbf16, #tpu.memory_space<vmem>>, %arg5: memref<1x128xf32, #tpu.memory_space<vmem>>, %arg6: memref<128x784xbf16, #tpu.memory_space<vmem>>, %arg7: memref<1x784xf32, #tpu.memory_space<vmem>>, %arg8: memref<8x784xbf16, #tpu.memory_space<vmem>>) attributes {dimension_semantics = [#tpu.dimension_semantics<parallel>], iteration_bounds = array<i64: 1>, scalar_prefetch = 0 : i64, scratch_operands = 0 : i64, tpu.core_type = #tpu.core_type<tc>, window_params = [{transform_indices = @transform_0, window_bounds = array<i64: 8, 784>}, {pipeline_mode = #tpu.pipeline_mode<synchronous>, transform_indices = @transform_1, window_bounds = array<i64: 784, 128>}, {pipeline_mode = #tpu.pipeline_mode<synchronous>, transform_indices = @transform_2, window_bounds = array<i64: 1, 128>}, {pipeline_mode = #tpu.pipeline_mode<synchronous>, transform_indices = @transform_3, window_bounds = array<i64: 128, 128>}, {pipeline_mode = #tpu.pipeline_mode<synchronous>, transform_indices = @transform_4, window_bounds = array<i64: 1, 128>}, {pipeline_mode = #tpu.pipeline_mode<synchronous>, transform_indices = @transform_5, window_bounds = array<i64: 128, 784>}, {pipeline_mode = #tpu.pipeline_mode<synchronous>, transform_indices = @transform_6, window_bounds = array<i64: 1, 784>}, {transform_indices = @transform_7, window_bounds = array<i64: 8, 784>}]} {
    %c0 = arith.constant 0 : index
    %c0_0 = arith.constant 0 : index
    %0 = vector.load %arg1[%c0, %c0_0] : memref<8x784xbf16, #tpu.memory_space<vmem>>, vector<8x784xbf16>
    %c0_1 = arith.constant 0 : index
    %c0_2 = arith.constant 0 : index
    %1 = vector.load %arg2[%c0_1, %c0_2] : memref<784x128xbf16, #tpu.memory_space<vmem>>, vector<784x128xbf16>
    %cst = arith.constant dense<0.000000e+00> : vector<8x128xf32>
    %2 = tpu.matmul %0, %1, %cst {dimension_numbers = #tpu.dot_dimension_numbers<[1], [0], [0], [1], [0, 0, 1, 1], [], []>} : vector<8x784xbf16>, vector<784x128xbf16>, vector<8x128xf32> -> vector<8x128xf32>
    %c0_3 = arith.constant 0 : index
    %c0_4 = arith.constant 0 : index
    %3 = vector.load %arg3[%c0_3, %c0_4] : memref<1x128xf32, #tpu.memory_space<vmem>>, vector<1x128xf32>
    %4 = vector.broadcast %3 : vector<1x128xf32> to vector<8x128xf32>
    %5 = arith.addf %2, %4 : vector<8x128xf32>
    %cst_5 = arith.constant 0.000000e+00 : f32
    %6 = vector.broadcast %cst_5 : f32 to vector<8x128xf32>
    %7 = arith.maximumf %5, %6 : vector<8x128xf32>
    %8 = arith.truncf %7 : vector<8x128xf32> to vector<8x128xbf16>
    %c0_6 = arith.constant 0 : index
    %c0_7 = arith.constant 0 : index
    %9 = vector.load %arg4[%c0_6, %c0_7] : memref<128x128xbf16, #tpu.memory_space<vmem>>, vector<128x128xbf16>
    %cst_8 = arith.constant dense<0.000000e+00> : vector<8x128xf32>
    %10 = tpu.matmul %8, %9, %cst_8 {dimension_numbers = #tpu.dot_dimension_numbers<[1], [0], [0], [1], [0, 0, 1, 1], [], []>} : vector<8x128xbf16>, vector<128x128xbf16>, vector<8x128xf32> -> vector<8x128xf32>
    %c0_9 = arith.constant 0 : index
    %c0_10 = arith.constant 0 : index
    %11 = vector.load %arg5[%c0_9, %c0_10] : memref<1x128xf32, #tpu.memory_space<vmem>>, vector<1x128xf32>
    %12 = vector.broadcast %11 : vector<1x128xf32> to vector<8x128xf32>
    %13 = arith.addf %10, %12 : vector<8x128xf32>
    %cst_11 = arith.constant 0.000000e+00 : f32
    %14 = vector.broadcast %cst_11 : f32 to vector<8x128xf32>
    %15 = arith.maximumf %13, %14 : vector<8x128xf32>
    %16 = arith.truncf %15 : vector<8x128xf32> to vector<8x128xbf16>
    %c0_12 = arith.constant 0 : index
    %c0_13 = arith.constant 0 : index
    %17 = vector.load %arg6[%c0_12, %c0_13] : memref<128x784xbf16, #tpu.memory_space<vmem>>, vector<128x784xbf16>
    %cst_14 = arith.constant dense<0.000000e+00> : vector<8x784xf32>
    %18 = tpu.matmul %16, %17, %cst_14 {dimension_numbers = #tpu.dot_dimension_numbers<[1], [0], [0], [1], [0, 0, 1, 1], [], []>} : vector<8x128xbf16>, vector<128x784xbf16>, vector<8x784xf32> -> vector<8x784xf32>
    %c0_15 = arith.constant 0 : index
    %c0_16 = arith.constant 0 : index
    %19 = vector.load %arg7[%c0_15, %c0_16] : memref<1x784xf32, #tpu.memory_space<vmem>>, vector<1x784xf32>
    %20 = vector.broadcast %19 : vector<1x784xf32> to vector<8x784xf32>
    %21 = arith.addf %18, %20 : vector<8x784xf32>
    %22 = arith.truncf %21 : vector<8x784xf32> to vector<8x784xbf16>
    %c0_17 = arith.constant 0 : index
    %c0_18 = arith.constant 0 : index
    %23 = vector.load %arg8[%c0_17, %c0_18] : memref<8x784xbf16, #tpu.memory_space<vmem>>, vector<8x784xbf16>
    tpu.vector_store %arg8[%c0_17, %c0_18], %22 {strides = array<i32>} : memref<8x784xbf16, #tpu.memory_space<vmem>>, vector<8x784xbf16>,
    return
  }
  func.func @transform_0(%arg0: i32) -> (i32, i32) {
    %c0_i32 = arith.constant 0 : i32
    %c0_i32_0 = arith.constant 0 : i32
    return %arg0, %c0_i32 : i32, i32
  }
  func.func @transform_1(%arg0: i32) -> (i32, i32) {
    %c0_i32 = arith.constant 0 : i32
    %c0_i32_0 = arith.constant 0 : i32
    %c0_i32_1 = arith.constant 0 : i32
    return %c0_i32, %c0_i32_0 : i32, i32
  }
  func.func @transform_2(%arg0: i32) -> (i32, i32) {
    %c0_i32 = arith.constant 0 : i32
    %c0_i32_0 = arith.constant 0 : i32
    %c0_i32_1 = arith.constant 0 : i32
    return %c0_i32, %c0_i32_0 : i32, i32
  }
  func.func @transform_3(%arg0: i32) -> (i32, i32) {
    %c0_i32 = arith.constant 0 : i32
    %c0_i32_0 = arith.constant 0 : i32
    %c0_i32_1 = arith.constant 0 : i32
    return %c0_i32, %c0_i32_0 : i32, i32
  }
  func.func @transform_4(%arg0: i32) -> (i32, i32) {
    %c0_i32 = arith.constant 0 : i32
    %c0_i32_0 = arith.constant 0 : i32
    %c0_i32_1 = arith.constant 0 : i32
    return %c0_i32, %c0_i32_0 : i32, i32
  }
  func.func @transform_5(%arg0: i32) -> (i32, i32) {
    %c0_i32 = arith.constant 0 : i32
    %c0_i32_0 = arith.constant 0 : i32
    %c0_i32_1 = arith.constant 0 : i32
    return %c0_i32, %c0_i32_0 : i32, i32
  }
  func.func @transform_6(%arg0: i32) -> (i32, i32) {
    %c0_i32 = arith.constant 0 : i32
    %c0_i32_0 = arith.constant 0 : i32
    %c0_i32_1 = arith.constant 0 : i32
    return %c0_i32, %c0_i32_0 : i32, i32
  }
  func.func @transform_7(%arg0: i32) -> (i32, i32) {
    %c0_i32 = arith.constant 0 : i32
    %c0_i32_0 = arith.constant 0 : i32
    return %arg0, %c0_i32 : i32, i32
  }
}

</mosaic_0001>

<llo_original>
// kernel: tpu_custom_call.1
$region0: #{tpu_custom_call.1}
  #allocation0 [shape = 'u32[]', space=smem, size = 0x4, offset = 0x4, fixed_abs, tag = 'smem constant byte address 0x4 - core index']
  #allocation1 [shape = 'u32[144,128]{1,0:T(1,128)}', space=vmem, size = 0x12000, scoped, tag = 'internal scratch']
  %s0 = inlined_call_operand.vmem [shape: bf16[8,784], index: 0, kind: input, shape index: {}]
  %s1 = inlined_call_operand.vmem [shape: bf16[784,128], index: 1, kind: input, shape index: {}]
  %s2 = inlined_call_operand.vmem [shape: f32[1,128], index: 2, kind: input, shape index: {}]
  %s3 = inlined_call_operand.vmem [shape: bf16[128,128], index: 3, kind: input, shape index: {}]
  %s4 = inlined_call_operand.vmem [shape: f32[1,128], index: 4, kind: input, shape index: {}]
  %s5 = inlined_call_operand.vmem [shape: bf16[128,784], index: 5, kind: input, shape index: {}]
  %s6 = inlined_call_operand.vmem [shape: f32[1,784], index: 6, kind: input, shape index: {}]
  %s7 = inlined_call_operand.hbm [shape: bf16[8,784], index: 7, kind: output, shape index: {}]
  %s8 = sld [smem:[#allocation0]]
  $region38: #{tpu_custom_call.1} parent=0
    _
  %s10 = ssub.s32 1, %s8
  %s11 = scalar_select 0, %s10, %s8
  $region1: #{tpu_custom_call.1} parent=0
    #allocation2 [shape = 'u8[14336]{0}', space=vmem, size = 0x3800, scoped, tag = 'output window, operand 0, single buffered']
    #allocation3 [shape = 's32[1]{0}', space=sflag, size = 0x4, scoped, tag = 'scoped memory for tpu_custom_call.1']
    %12 = vsyncpa [#allocation3], 0
    // Predicated region
    $region2: #{tpu_custom_call.1} parent=1 // pred_check
      _
    $region3: #{tpu_custom_call.1} parent=1 // pred_check_branch
      %14 = sbr.rel (0) target = $region5
    $region4: #{tpu_custom_call.1} parent=1 // pred_region
      _
    $region5: #{tpu_custom_call.1} parent=1 // pred_fallthru
      _
    // Predicated region
    $region6: #{tpu_custom_call.1} parent=1 // pred_check
      _
    $region7: #{tpu_custom_call.1} parent=1 // pred_check_branch
      %16 = sbr.rel (0) target = $region9
    $region8: #{tpu_custom_call.1} parent=1 // pred_region
      _
    $region9: #{tpu_custom_call.1} parent=1 // pred_fallthru
      _
    // Predicated region
    $region10: #{tpu_custom_call.1} parent=1 // pred_check
      _
    $region11: #{tpu_custom_call.1} parent=1 // pred_check_branch
      %18 = sbr.rel (0) target = $region13
    $region12: #{tpu_custom_call.1} parent=1 // pred_region
      _
    $region13: #{tpu_custom_call.1} parent=1 // pred_fallthru
      _
    // Predicated region
    $region14: #{tpu_custom_call.1} parent=1 // pred_check
      _
    $region15: #{tpu_custom_call.1} parent=1 // pred_check_branch
      %20 = sbr.rel (0) target = $region17
    $region16: #{tpu_custom_call.1} parent=1 // pred_region
      _
    $region17: #{tpu_custom_call.1} parent=1 // pred_fallthru
      _
    // Predicated region
    $region18: #{tpu_custom_call.1} parent=1 // pred_check
      _
    $region19: #{tpu_custom_call.1} parent=1 // pred_check_branch
      %22 = sbr.rel (0) target = $region21
    $region20: #{tpu_custom_call.1} parent=1 // pred_region
      _
    $region21: #{tpu_custom_call.1} parent=1 // pred_fallthru
      _
    // Predicated region
    $region22: #{tpu_custom_call.1} parent=1 // pred_check
      _
    $region23: #{tpu_custom_call.1} parent=1 // pred_check_branch
      %24 = sbr.rel (0) target = $region25
    $region24: #{tpu_custom_call.1} parent=1 // pred_region
      _
    $region25: #{tpu_custom_call.1} parent=1 // pred_fallthru
      _
    // Predicated region
    $region26: #{tpu_custom_call.1} parent=1 // pred_check
      _
    $region27: #{tpu_custom_call.1} parent=1 // pred_check_branch
      %26 = sbr.rel (0) target = $region29
    $region28: #{tpu_custom_call.1} parent=1 // pred_region
      _
    $region29: #{tpu_custom_call.1} parent=1 // pred_fallthru
      _
    %v28 = vld [vmem:[%s0] sm:$0xff]
    %v29 = vld [vmem:[%s0 + $0x8] sm:$0xff]
    %v30 = vld [vmem:[%s0 + $0x10] sm:$0xff]
    %v31 = vld [vmem:[%s0 + $0x18] sm:$0xf]
    %v32 = vld [vmem:[%s1] sm:$0xf]
    %v33 = vld [vmem:[%s1 + $0x4] sm:$0xf]
    %v34 = vld [vmem:[%s1 + $0x8] sm:$0xf]
    %v35 = vld [vmem:[%s1 + $0xc] sm:$0xf]
    %v36 = vld [vmem:[%s1 + $0x10] sm:$0xf]
    %v37 = vld [vmem:[%s1 + $0x14] sm:$0xf]
    %v38 = vld [vmem:[%s1 + $0x18] sm:$0xf]
    %v39 = vld [vmem:[%s1 + $0x1c] sm:$0xf]
    %v40 = vld [vmem:[%s1 + $0x20] sm:$0xf]
    %v41 = vld [vmem:[%s1 + $0x24] sm:$0xf]
    %v42 = vld [vmem:[%s1 + $0x28] sm:$0xf]
    %v43 = vld [vmem:[%s1 + $0x2c] sm:$0xf]
    %v44 = vld [vmem:[%s1 + $0x30] sm:$0xf]
    %v45 = vld [vmem:[%s1 + $0x34] sm:$0xf]
    %v46 = vld [vmem:[%s1 + $0x38] sm:$0xf]
    %v47 = vld [vmem:[%s1 + $0x3c] sm:$0xf]
    %v48 = vld [vmem:[%s1 + $0x40] sm:$0xf]
    %v49 = vld [vmem:[%s1 + $0x44] sm:$0xf]
    %v50 = vld [vmem:[%s1 + $0x48] sm:$0xf]
    %v51 = vld [vmem:[%s1 + $0x4c] sm:$0xf]
    %v52 = vld [vmem:[%s1 + $0x50] sm:$0xf]
    %v53 = vld [vmem:[%s1 + $0x54] sm:$0xf]
    %v54 = vld [vmem:[%s1 + $0x58] sm:$0xf]
    %v55 = vld [vmem:[%s1 + $0x5c] sm:$0xf]
    %v56 = vld [vmem:[%s1 + $0x60] sm:$0xf]
    %v57 = vld [vmem:[%s1 + $0x64] sm:$0xf]
    %v58 = vld [vmem:[%s1 + $0x68] sm:$0xf]
    %v59 = vld [vmem:[%s1 + $0x6c] sm:$0xf]
    %v60 = vld [vmem:[%s1 + $0x70] sm:$0xf]
    %v61 = vld [vmem:[%s1 + $0x74] sm:$0xf]
    %v62 = vld [vmem:[%s1 + $0x78] sm:$0xf]
    %v63 = vld [vmem:[%s1 + $0x7c] sm:$0xf]
    %v64 = vld [vmem:[%s1 + $0x80] sm:$0xf]
    %v65 = vld [vmem:[%s1 + $0x84] sm:$0xf]
    %v66 = vld [vmem:[%s1 + $0x88] sm:$0xf]
    %v67 = vld [vmem:[%s1 + $0x8c] sm:$0xf]
    %v68 = vld [vmem:[%s1 + $0x90] sm:$0xf]
    %v69 = vld [vmem:[%s1 + $0x94] sm:$0xf]
    %v70 = vld [vmem:[%s1 + $0x98] sm:$0xf]
    %v71 = vld [vmem:[%s1 + $0x9c] sm:$0xf]
    %v72 = vld [vmem:[%s1 + $0xa0] sm:$0xf]
    %v73 = vld [vmem:[%s1 + $0xa4] sm:$0xf]
    %v74 = vld [vmem:[%s1 + $0xa8] sm:$0xf]
    %v75 = vld [vmem:[%s1 + $0xac] sm:$0xf]
    %v76 = vld [vmem:[%s1 + $0xb0] sm:$0xf]
    %v77 = vld [vmem:[%s1 + $0xb4] sm:$0xf]
    %v78 = vld [vmem:[%s1 + $0xb8] sm:$0xf]
    %v79 = vld [vmem:[%s1 + $0xbc] sm:$0xf]
    %v80 = vld [vmem:[%s1 + $0xc0] sm:$0xf]
    %v81 = vld [vmem:[%s1 + $0xc4] sm:$0xf]
    %v82 = vld [vmem:[%s1 + $0xc8] sm:$0xf]
    %v83 = vld [vmem:[%s1 + $0xcc] sm:$0xf]
    %v84 = vld [vmem:[%s1 + $0xd0] sm:$0xf]
    %v85 = vld [vmem:[%s1 + $0xd4] sm:$0xf]
    %v86 = vld [vmem:[%s1 + $0xd8] sm:$0xf]
    %v87 = vld [vmem:[%s1 + $0xdc] sm:$0xf]
    %v88 = vld [vmem:[%s1 + $0xe0] sm:$0xf]
    %v89 = vld [vmem:[%s1 + $0xe4] sm:$0xf]
    %v90 = vld [vmem:[%s1 + $0xe8] sm:$0xf]
    %v91 = vld [vmem:[%s1 + $0xec] sm:$0xf]
    %v92 = vld [vmem:[%s1 + $0xf0] sm:$0xf]
    %v93 = vld [vmem:[%s1 + $0xf4] sm:$0xf]
    %v94 = vld [vmem:[%s1 + $0xf8] sm:$0xf]
    %v95 = vld [vmem:[%s1 + $0xfc] sm:$0xf]
    %v96 = vld [vmem:[%s1 + $0x100] sm:$0xf]
    %v97 = vld [vmem:[%s1 + $0x104] sm:$0xf]
    %v98 = vld [vmem:[%s1 + $0x108] sm:$0xf]
    %v99 = vld [vmem:[%s1 + $0x10c] sm:$0xf]
    %v100 = vld [vmem:[%s1 + $0x110] sm:$0xf]
    %v101 = vld [vmem:[%s1 + $0x114] sm:$0xf]
    %v102 = vld [vmem:[%s1 + $0x118] sm:$0xf]
    %v103 = vld [vmem:[%s1 + $0x11c] sm:$0xf]
    %v104 = vld [vmem:[%s1 + $0x120] sm:$0xf]
    %v105 = vld [vmem:[%s1 + $0x124] sm:$0xf]
    %v106 = vld [vmem:[%s1 + $0x128] sm:$0xf]
    %v107 = vld [vmem:[%s1 + $0x12c] sm:$0xf]
    %v108 = vld [vmem:[%s1 + $0x130] sm:$0xf]
    %v109 = vld [vmem:[%s1 + $0x134] sm:$0xf]
    %v110 = vld [vmem:[%s1 + $0x138] sm:$0xf]
    %v111 = vld [vmem:[%s1 + $0x13c] sm:$0xf]
    %v112 = vld [vmem:[%s1 + $0x140] sm:$0xf]
    %v113 = vld [vmem:[%s1 + $0x144] sm:$0xf]
    %v114 = vld [vmem:[%s1 + $0x148] sm:$0xf]
    %v115 = vld [vmem:[%s1 + $0x14c] sm:$0xf]
    %v116 = vld [vmem:[%s1 + $0x150] sm:$0xf]
    %v117 = vld [vmem:[%s1 + $0x154] sm:$0xf]
    %v118 = vld [vmem:[%s1 + $0x158] sm:$0xf]
    %v119 = vld [vmem:[%s1 + $0x15c] sm:$0xf]
    %v120 = vld [vmem:[%s1 + $0x160] sm:$0xf]
    %v121 = vld [vmem:[%s1 + $0x164] sm:$0xf]
    %v122 = vld [vmem:[%s1 + $0x168] sm:$0xf]
    %v123 = vld [vmem:[%s1 + $0x16c] sm:$0xf]
    %v124 = vld [vmem:[%s1 + $0x170] sm:$0xf]
    %v125 = vld [vmem:[%s1 + $0x174] sm:$0xf]
    %v126 = vld [vmem:[%s1 + $0x178] sm:$0xf]
    %v127 = vld [vmem:[%s1 + $0x17c] sm:$0xf]
    %v128 = vld [vmem:[%s1 + $0x180] sm:$0xf]
    %v129 = vld [vmem:[%s1 + $0x184] sm:$0xf]
    %v130 = vld [vmem:[%s2] sm:$0x1]
    %v132 = vlaneseq
    %v133 = vshrl.u32 %v132, 7
    %v134 = vsub.s32 0, %v133
    %v135 = vrot.slane %v130, %v134
    %v141 = vunpack.c.l.b16 %v28
    %v142 = vunpack.c.h.b16 %v28
    %v143 = vunpack.c.l.b16 %v29
    %v144 = vunpack.c.h.b16 %v29
    %v145 = vunpack.c.l.b16 %v30
    %v146 = vunpack.c.h.b16 %v30
    %v147 = vunpack.c.l.b16 %v31
    %v148 = vpack.c.b16 %v141, %v141
    %v149 = vpack.c.b16 %v142, %v142
    %v150 = vpack.c.b16 %v143, %v143
    %v151 = vpack.c.b16 %v144, %v144
    %v152 = vpack.c.b16 %v145, %v145
    %v153 = vpack.c.b16 %v146, %v146
    %v154 = vpack.c.b16 %v147, %v147
    %v259 = vunpack.c.l.b16 %v32
    %v260 = vunpack.c.l.b16 %v33
    %v261 = vunpack.c.l.b16 %v34
    %v262 = vunpack.c.l.b16 %v35
    %v263 = vunpack.c.l.b16 %v36
    %v264 = vunpack.c.l.b16 %v37
    %v265 = vunpack.c.l.b16 %v38
    %v266 = vunpack.c.l.b16 %v39
    %v267 = vunpack.c.l.b16 %v40
    %v268 = vunpack.c.l.b16 %v41
    %v269 = vunpack.c.l.b16 %v42
    %v270 = vunpack.c.l.b16 %v43
    %v271 = vunpack.c.l.b16 %v44
    %v272 = vunpack.c.l.b16 %v45
    %v273 = vunpack.c.l.b16 %v46
    %v274 = vunpack.c.l.b16 %v47
    %v275 = vunpack.c.l.b16 %v48
    %v276 = vunpack.c.l.b16 %v49
    %v277 = vunpack.c.l.b16 %v50
    %v278 = vunpack.c.l.b16 %v51
    %v279 = vunpack.c.l.b16 %v52
    %v280 = vunpack.c.l.b16 %v53
    %v281 = vunpack.c.l.b16 %v54
    %v282 = vunpack.c.l.b16 %v55
    %v283 = vunpack.c.l.b16 %v56
    %v284 = vunpack.c.l.b16 %v57
    %v285 = vunpack.c.l.b16 %v58
    %v286 = vunpack.c.l.b16 %v59
    %v287 = vunpack.c.l.b16 %v60
    %v288 = vunpack.c.l.b16 %v61
    %v289 = vunpack.c.l.b16 %v62
    %v290 = vunpack.c.l.b16 %v63
    %v291 = vunpack.c.l.b16 %v64
    %v292 = vunpack.c.l.b16 %v65
    %v293 = vunpack.c.l.b16 %v66
    %v294 = vunpack.c.l.b16 %v67
    %v295 = vunpack.c.l.b16 %v68
    %v296 = vunpack.c.l.b16 %v69
    %v297 = vunpack.c.l.b16 %v70
    %v298 = vunpack.c.l.b16 %v71
    %v299 = vunpack.c.l.b16 %v72
    %v300 = vunpack.c.l.b16 %v73
    %v301 = vunpack.c.l.b16 %v74
    %v302 = vunpack.c.l.b16 %v75
    %v303 = vunpack.c.l.b16 %v76
    %v304 = vunpack.c.l.b16 %v77
    %v305 = vunpack.c.l.b16 %v78
    %v306 = vunpack.c.l.b16 %v79
    %v307 = vunpack.c.l.b16 %v80
    %v308 = vunpack.c.l.b16 %v81
    %v309 = vunpack.c.l.b16 %v82
    %v310 = vunpack.c.l.b16 %v83
    %v311 = vunpack.c.l.b16 %v84
    %v312 = vunpack.c.l.b16 %v85
    %v313 = vunpack.c.l.b16 %v86
    %v314 = vunpack.c.l.b16 %v87
    %v315 = vunpack.c.l.b16 %v88
    %v316 = vunpack.c.l.b16 %v89
    %v317 = vunpack.c.l.b16 %v90
    %v318 = vunpack.c.l.b16 %v91
    %v319 = vunpack.c.l.b16 %v92
    %v320 = vunpack.c.l.b16 %v93
    %v321 = vunpack.c.l.b16 %v94
    %v322 = vunpack.c.l.b16 %v95
    %v323 = vunpack.c.l.b16 %v96
    %v324 = vunpack.c.l.b16 %v97
    %v325 = vunpack.c.l.b16 %v98
    %v326 = vunpack.c.l.b16 %v99
    %v327 = vunpack.c.l.b16 %v100
    %v328 = vunpack.c.l.b16 %v101
    %v329 = vunpack.c.l.b16 %v102
    %v330 = vunpack.c.l.b16 %v103
    %v331 = vunpack.c.l.b16 %v104
    %v332 = vunpack.c.l.b16 %v105
    %v333 = vunpack.c.l.b16 %v106
    %v334 = vunpack.c.l.b16 %v107
    %v335 = vunpack.c.l.b16 %v108
    %v336 = vunpack.c.l.b16 %v109
    %v337 = vunpack.c.l.b16 %v110
    %v338 = vunpack.c.l.b16 %v111
    %v339 = vunpack.c.l.b16 %v112
    %v340 = vunpack.c.l.b16 %v113
    %v341 = vunpack.c.l.b16 %v114
    %v342 = vunpack.c.l.b16 %v115
    %v343 = vunpack.c.l.b16 %v116
    %v344 = vunpack.c.l.b16 %v117
    %v345 = vunpack.c.l.b16 %v118
    %v346 = vunpack.c.l.b16 %v119
    %v347 = vunpack.c.l.b16 %v120
    %v348 = vunpack.c.l.b16 %v121
    %v349 = vunpack.c.l.b16 %v122
    %v350 = vunpack.c.l.b16 %v123
    %v351 = vunpack.c.l.b16 %v124
    %v352 = vunpack.c.l.b16 %v125
    %v353 = vunpack.c.l.b16 %v126
    %v354 = vunpack.c.l.b16 %v127
    %v355 = vunpack.c.l.b16 %v128
    %v356 = vunpack.c.l.b16 %v129
    %v357 = vpack.c.b16 %v260, %v259
    %v358 = vpack.c.b16 %v262, %v261
    %v359 = vpack.c.b16 %v264, %v263
    %v360 = vpack.c.b16 %v266, %v265
    %v361 = vpack.c.b16 %v268, %v267
    %v362 = vpack.c.b16 %v270, %v269
    %v363 = vpack.c.b16 %v272, %v271
    %v364 = vpack.c.b16 %v274, %v273
    %v365 = vpack.c.b16 %v276, %v275
    %v366 = vpack.c.b16 %v278, %v277
    %v367 = vpack.c.b16 %v280, %v279
    %v368 = vpack.c.b16 %v282, %v281
    %v369 = vpack.c.b16 %v284, %v283
    %v370 = vpack.c.b16 %v286, %v285
    %v371 = vpack.c.b16 %v288, %v287
    %v372 = vpack.c.b16 %v290, %v289
    %v373 = vpack.c.b16 %v292, %v291
    %v374 = vpack.c.b16 %v294, %v293
    %v375 = vpack.c.b16 %v296, %v295
    %v376 = vpack.c.b16 %v298, %v297
    %v377 = vpack.c.b16 %v300, %v299
    %v378 = vpack.c.b16 %v302, %v301
    %v379 = vpack.c.b16 %v304, %v303
    %v380 = vpack.c.b16 %v306, %v305
    %v381 = vpack.c.b16 %v308, %v307
    %v382 = vpack.c.b16 %v310, %v309
    %v383 = vpack.c.b16 %v312, %v311
    %v384 = vpack.c.b16 %v314, %v313
    %v385 = vpack.c.b16 %v316, %v315
    %v386 = vpack.c.b16 %v318, %v317
    %v387 = vpack.c.b16 %v320, %v319
    %v388 = vpack.c.b16 %v322, %v321
    %v389 = vpack.c.b16 %v324, %v323
    %v390 = vpack.c.b16 %v326, %v325
    %v391 = vpack.c.b16 %v328, %v327
    %v392 = vpack.c.b16 %v330, %v329
    %v393 = vpack.c.b16 %v332, %v331
    %v394 = vpack.c.b16 %v334, %v333
    %v395 = vpack.c.b16 %v336, %v335
    %v396 = vpack.c.b16 %v338, %v337
    %v397 = vpack.c.b16 %v340, %v339
    %v398 = vpack.c.b16 %v342, %v341
    %v399 = vpack.c.b16 %v344, %v343
    %v400 = vpack.c.b16 %v346, %v345
    %v401 = vpack.c.b16 %v348, %v347
    %v402 = vpack.c.b16 %v350, %v349
    %v403 = vpack.c.b16 %v352, %v351
    %v404 = vpack.c.b16 %v354, %v353
    %v405 = vpack.c.b16 %v356, %v355
    %vm455 = vcmask 130048
    %v457 = vsel %vm455, %v154, 0
    %459 = vmatprep.subr.bf16.mxu0 0
    %460 = vmatpush1.bf16.msra.mxu0 %v357
    %461 = vmatprep.subr.bf16.mxu0 0
    %462 = vmatpush1.bf16.msra.mxu0 %v358
    %463 = vmatprep.subr.bf16.mxu0 0
    %464 = vmatpush1.bf16.msra.mxu0 %v359
    %465 = vmatprep.subr.bf16.mxu0 0
    %466 = vmatpush1.bf16.msra.mxu0 %v360
    %467 = vmatprep.subr.bf16.mxu0 0
    %468 = vmatpush1.bf16.msra.mxu0 %v361
    %469 = vmatprep.subr.bf16.mxu0 0
    %470 = vmatpush1.bf16.msra.mxu0 %v362
    %471 = vmatprep.subr.bf16.mxu0 0
    %472 = vmatpush1.bf16.msra.mxu0 %v363
    %473 = vmatprep.subr.bf16.mxu0 0
    %474 = vmatpush1.bf16.msra.mxu0 %v364
    %475 = vmatprep.subr.bf16.mxu0 0
    %476 = vmatpush1.bf16.msra.mxu0 %v365
    %477 = vmatprep.subr.bf16.mxu0 0
    %478 = vmatpush1.bf16.msra.mxu0 %v366
    %479 = vmatprep.subr.bf16.mxu0 0
    %480 = vmatpush1.bf16.msra.mxu0 %v367
    %481 = vmatprep.subr.bf16.mxu0 0
    %482 = vmatpush1.bf16.msra.mxu0 %v368
    %483 = vmatprep.subr.bf16.mxu0 0
    %484 = vmatpush1.bf16.msra.mxu0 %v369
    %485 = vmatprep.subr.bf16.mxu0 0
    %486 = vmatpush1.bf16.msra.mxu0 %v370
    %487 = vmatprep.subr.bf16.mxu0 0
    %488 = vmatpush1.bf16.msra.mxu0 %v371
    %489 = vmatprep.subr.bf16.mxu0 0
    %490 = vmatpush1.bf16.msra.mxu0 %v372
    %491 = vmatprep.mubr.bf16.mxu0 %v149
    %492 = vmatmul.mubr.bf16.gmra.mrb[0].mxu0 %v148
    %v493 = vpop.f32.mrb[0].mxu0
    %v494 = vadd.f32 %v135, %v493
    %v495 = vpop.f32.mrb[0].mxu0
    %v496 = vpop.f32.mrb[0].mxu0
    %v497 = vpop.f32.mrb[0].mxu0
    %498 = vdwg.mxu0
    %499 = vmatprep.subr.bf16.mxu0 0
    %500 = vmatpush1.bf16.msra.mxu0 %v373
    %501 = vmatprep.subr.bf16.mxu0 0
    %502 = vmatpush1.bf16.msra.mxu0 %v374
    %503 = vmatprep.subr.bf16.mxu0 0
    %504 = vmatpush1.bf16.msra.mxu0 %v375
    %505 = vmatprep.subr.bf16.mxu0 0
    %506 = vmatpush1.bf16.msra.mxu0 %v376
    %507 = vmatprep.subr.bf16.mxu0 0
    %508 = vmatpush1.bf16.msra.mxu0 %v377
    %509 = vmatprep.subr.bf16.mxu0 0
    %510 = vmatpush1.bf16.msra.mxu0 %v378
    %511 = vmatprep.subr.bf16.mxu0 0
    %512 = vmatpush1.bf16.msra.mxu0 %v379
    %513 = vmatprep.subr.bf16.mxu0 0
    %514 = vmatpush1.bf16.msra.mxu0 %v380
    %515 = vmatprep.subr.bf16.mxu0 0
    %516 = vmatpush1.bf16.msra.mxu0 %v381
    %517 = vmatprep.subr.bf16.mxu0 0
    %518 = vmatpush1.bf16.msra.mxu0 %v382
    %519 = vmatprep.subr.bf16.mxu0 0
    %520 = vmatpush1.bf16.msra.mxu0 %v383
    %521 = vmatprep.subr.bf16.mxu0 0
    %522 = vmatpush1.bf16.msra.mxu0 %v384
    %523 = vmatprep.subr.bf16.mxu0 0
    %524 = vmatpush1.bf16.msra.mxu0 %v385
    %525 = vmatprep.subr.bf16.mxu0 0
    %526 = vmatpush1.bf16.msra.mxu0 %v386
    %527 = vmatprep.subr.bf16.mxu0 0
    %528 = vmatpush1.bf16.msra.mxu0 %v387
    %529 = vmatprep.subr.bf16.mxu0 0
    %530 = vmatpush1.bf16.msra.mxu0 %v388
    %531 = vmatprep.mubr.bf16.mxu0 %v151
    %532 = vmatmul.mubr.bf16.gmra.mrb[0].mxu0 %v150
    %v533 = vpop.f32.mrb[0].mxu0
    %v534 = vadd.f32 %v494, %v533
    %v535 = vpop.f32.mrb[0].mxu0
    %v536 = vpop.f32.mrb[0].mxu0
    %v537 = vpop.f32.mrb[0].mxu0
    %538 = vdwg.mxu0
    %539 = vmatprep.subr.bf16.mxu0 0
    %540 = vmatpush1.bf16.msra.mxu0 %v389
    %541 = vmatprep.subr.bf16.mxu0 0
    %542 = vmatpush1.bf16.msra.mxu0 %v390
    %543 = vmatprep.subr.bf16.mxu0 0
    %544 = vmatpush1.bf16.msra.mxu0 %v391
    %545 = vmatprep.subr.bf16.mxu0 0
    %546 = vmatpush1.bf16.msra.mxu0 %v392
    %547 = vmatprep.subr.bf16.mxu0 0
    %548 = vmatpush1.bf16.msra.mxu0 %v393
    %549 = vmatprep.subr.bf16.mxu0 0
    %550 = vmatpush1.bf16.msra.mxu0 %v394
    %551 = vmatprep.subr.bf16.mxu0 0
    %552 = vmatpush1.bf16.msra.mxu0 %v395
    %553 = vmatprep.subr.bf16.mxu0 0
    %554 = vmatpush1.bf16.msra.mxu0 %v396
    %555 = vmatprep.subr.bf16.mxu0 0
    %556 = vmatpush1.bf16.msra.mxu0 %v397
    %557 = vmatprep.subr.bf16.mxu0 0
    %558 = vmatpush1.bf16.msra.mxu0 %v398
    %559 = vmatprep.subr.bf16.mxu0 0
    %560 = vmatpush1.bf16.msra.mxu0 %v399
    %561 = vmatprep.subr.bf16.mxu0 0
    %562 = vmatpush1.bf16.msra.mxu0 %v400
    %563 = vmatprep.subr.bf16.mxu0 0
    %564 = vmatpush1.bf16.msra.mxu0 %v401
    %565 = vmatprep.subr.bf16.mxu0 0
    %566 = vmatpush1.bf16.msra.mxu0 %v402
    %567 = vmatprep.subr.bf16.mxu0 0
    %568 = vmatpush1.bf16.msra.mxu0 %v403
    %569 = vmatprep.subr.bf16.mxu0 0
    %570 = vmatpush1.bf16.msra.mxu0 %v404
    %571 = vmatprep.mubr.bf16.mxu0 %v153
    %572 = vmatmul.mubr.bf16.gmra.mrb[0].mxu0 %v152
    %v573 = vpop.f32.mrb[0].mxu0
    %v574 = vadd.f32 %v534, %v573
    %v575 = vpop.f32.mrb[0].mxu0
    %v576 = vpop.f32.mrb[0].mxu0
    %v577 = vpop.f32.mrb[0].mxu0
    %578 = vdwg.mxu0
    %579 = vmatprep.subr.bf16.mxu0 0
    %580 = vmatpush1.bf16.msra.mxu0 %v405
    %581 = vmatprep.subr.bf16.mxu0 0
    %582 = vmatpush1.bf16.msra.mxu0 0
    %583 = vmatprep.subr.bf16.mxu0 0
    %584 = vmatpush1.bf16.msra.mxu0 0
    %585 = vmatprep.subr.bf16.mxu0 0
    %586 = vmatpush1.bf16.msra.mxu0 0
    %587 = vmatprep.subr.bf16.mxu0 0
    %588 = vmatpush1.bf16.msra.mxu0 0
    %589 = vmatprep.subr.bf16.mxu0 0
    %590 = vmatpush1.bf16.msra.mxu0 0
    %591 = vmatprep.subr.bf16.mxu0 0
    %592 = vmatpush1.bf16.msra.mxu0 0
    %593 = vmatprep.subr.bf16.mxu0 0
    %594 = vmatpush1.bf16.msra.mxu0 0
    %595 = vmatprep.subr.bf16.mxu0 0
    %596 = vmatpush1.bf16.msra.mxu0 0
    %597 = vmatprep.subr.bf16.mxu0 0
    %598 = vmatpush1.bf16.msra.mxu0 0
    %599 = vmatprep.subr.bf16.mxu0 0
    %600 = vmatpush1.bf16.msra.mxu0 0
    %601 = vmatprep.subr.bf16.mxu0 0
    %602 = vmatpush1.bf16.msra.mxu0 0
    %603 = vmatprep.subr.bf16.mxu0 0
    %604 = vmatpush1.bf16.msra.mxu0 0
    %605 = vmatprep.subr.bf16.mxu0 0
    %606 = vmatpush1.bf16.msra.mxu0 0
    %607 = vmatprep.subr.bf16.mxu0 0
    %608 = vmatpush1.bf16.msra.mxu0 0
    %609 = vmatprep.subr.bf16.mxu0 0
    %610 = vmatpush1.bf16.msra.mxu0 0
    %611 = vmatprep.mubr.bf16.mxu0 0
    %612 = vmatmul.mubr.bf16.gmra.mrb[0].mxu0 %v457
    %v613 = vpop.f32.mrb[0].mxu0
    %v614 = vadd.f32 %v574, %v613
    %v615 = vpop.f32.mrb[0].mxu0
    %v616 = vpop.f32.mrb[0].mxu0
    %v617 = vpop.f32.mrb[0].mxu0
    %618 = vdwg.mxu0
    %v619 = vmax.f32 %v614, 0.0
    %v620 = vpack.c.bf16 %v619, %v619
    %v621 = vld [vmem:[%s3] sm:$0xf]
    %v622 = vld [vmem:[%s3 + $0x4] sm:$0xf]
    %v623 = vld [vmem:[%s3 + $0x8] sm:$0xf]
    %v624 = vld [vmem:[%s3 + $0xc] sm:$0xf]
    %v625 = vld [vmem:[%s3 + $0x10] sm:$0xf]
    %v626 = vld [vmem:[%s3 + $0x14] sm:$0xf]
    %v627 = vld [vmem:[%s3 + $0x18] sm:$0xf]
    %v628 = vld [vmem:[%s3 + $0x1c] sm:$0xf]
    %v629 = vld [vmem:[%s3 + $0x20] sm:$0xf]
    %v630 = vld [vmem:[%s3 + $0x24] sm:$0xf]
    %v631 = vld [vmem:[%s3 + $0x28] sm:$0xf]
    %v632 = vld [vmem:[%s3 + $0x2c] sm:$0xf]
    %v633 = vld [vmem:[%s3 + $0x30] sm:$0xf]
    %v634 = vld [vmem:[%s3 + $0x34] sm:$0xf]
    %v635 = vld [vmem:[%s3 + $0x38] sm:$0xf]
    %v636 = vld [vmem:[%s3 + $0x3c] sm:$0xf]
    %v637 = vld [vmem:[%s4] sm:$0x1]
    %v639 = vlaneseq
    %v640 = vshrl.u32 %v639, 7
    %v641 = vsub.s32 0, %v640
    %v642 = vrot.slane %v637, %v641
    %v660 = vunpack.c.l.b16 %v621
    %v661 = vunpack.c.l.b16 %v622
    %v662 = vunpack.c.l.b16 %v623
    %v663 = vunpack.c.l.b16 %v624
    %v664 = vunpack.c.l.b16 %v625
    %v665 = vunpack.c.l.b16 %v626
    %v666 = vunpack.c.l.b16 %v627
    %v667 = vunpack.c.l.b16 %v628
    %v668 = vunpack.c.l.b16 %v629
    %v669 = vunpack.c.l.b16 %v630
    %v670 = vunpack.c.l.b16 %v631
    %v671 = vunpack.c.l.b16 %v632
    %v672 = vunpack.c.l.b16 %v633
    %v673 = vunpack.c.l.b16 %v634
    %v674 = vunpack.c.l.b16 %v635
    %v675 = vunpack.c.l.b16 %v636
    %v676 = vpack.c.b16 %v661, %v660
    %v677 = vpack.c.b16 %v663, %v662
    %v678 = vpack.c.b16 %v665, %v664
    %v679 = vpack.c.b16 %v667, %v666
    %v680 = vpack.c.b16 %v669, %v668
    %v681 = vpack.c.b16 %v671, %v670
    %v682 = vpack.c.b16 %v673, %v672
    %v683 = vpack.c.b16 %v675, %v674
    %692 = vmatprep.subr.bf16.mxu0 0
    %693 = vmatpush1.bf16.msra.mxu0 %v676
    %694 = vmatprep.subr.bf16.mxu0 0
    %695 = vmatpush1.bf16.msra.mxu0 %v677
    %696 = vmatprep.subr.bf16.mxu0 0
    %697 = vmatpush1.bf16.msra.mxu0 %v678
    %698 = vmatprep.subr.bf16.mxu0 0
    %699 = vmatpush1.bf16.msra.mxu0 %v679
    %700 = vmatprep.subr.bf16.mxu0 0
    %701 = vmatpush1.bf16.msra.mxu0 %v680
    %702 = vmatprep.subr.bf16.mxu0 0
    %703 = vmatpush1.bf16.msra.mxu0 %v681
    %704 = vmatprep.subr.bf16.mxu0 0
    %705 = vmatpush1.bf16.msra.mxu0 %v682
    %706 = vmatprep.subr.bf16.mxu0 0
    %707 = vmatpush1.bf16.msra.mxu0 %v683
    %708 = vmatprep.subr.bf16.mxu0 0
    %709 = vmatpush1.bf16.msra.mxu0 0
    %710 = vmatprep.subr.bf16.mxu0 0
    %711 = vmatpush1.bf16.msra.mxu0 0
    %712 = vmatprep.subr.bf16.mxu0 0
    %713 = vmatpush1.bf16.msra.mxu0 0
    %714 = vmatprep.subr.bf16.mxu0 0
    %715 = vmatpush1.bf16.msra.mxu0 0
    %716 = vmatprep.subr.bf16.mxu0 0
    %717 = vmatpush1.bf16.msra.mxu0 0
    %718 = vmatprep.subr.bf16.mxu0 0
    %719 = vmatpush1.bf16.msra.mxu0 0
    %720 = vmatprep.subr.bf16.mxu0 0
    %721 = vmatpush1.bf16.msra.mxu0 0
    %722 = vmatprep.subr.bf16.mxu0 0
    %723 = vmatpush1.bf16.msra.mxu0 0
    %724 = vmatprep.mubr.bf16.mxu0 0
    %725 = vmatmul.mubr.bf16.gmra.mrb[0].mxu0 %v620
    %v726 = vpop.f32.mrb[0].mxu0
    %v727 = vadd.f32 %v642, %v726
    %v728 = vpop.f32.mrb[0].mxu0
    %v729 = vpop.f32.mrb[0].mxu0
    %v730 = vpop.f32.mrb[0].mxu0
    %731 = vdwg.mxu0
    %v732 = vmax.f32 %v727, 0.0
    %v733 = vpack.c.bf16 %v732, %v732
    %v734 = vld [vmem:[%s5] sm:$0xff]
    %v735 = vld [vmem:[%s5 + $0x8] sm:$0xff]
    %v736 = vld [vmem:[%s5 + $0x10] sm:$0xff]
    %v737 = vld [vmem:[%s5 + $0x18] sm:$0xf]
    %v738 = vld [vmem:[%s5 + $0x1c] sm:$0xff]
    %v739 = vld [vmem:[%s5 + $0x24] sm:$0xff]
    %v740 = vld [vmem:[%s5 + $0x2c] sm:$0xff]
    %v741 = vld [vmem:[%s5 + $0x34] sm:$0xf]
    %v742 = vld [vmem:[%s5 + $0x38] sm:$0xff]
    %v743 = vld [vmem:[%s5 + $0x40] sm:$0xff]
    %v744 = vld [vmem:[%s5 + $0x48] sm:$0xff]
    %v745 = vld [vmem:[%s5 + $0x50] sm:$0xf]
    %v746 = vld [vmem:[%s5 + $0x54] sm:$0xff]
    %v747 = vld [vmem:[%s5 + $0x5c] sm:$0xff]
    %v748 = vld [vmem:[%s5 + $0x64] sm:$0xff]
    %v749 = vld [vmem:[%s5 + $0x6c] sm:$0xf]
    %v750 = vld [vmem:[%s5 + $0x70] sm:$0xff]
    %v751 = vld [vmem:[%s5 + $0x78] sm:$0xff]
    %v752 = vld [vmem:[%s5 + $0x80] sm:$0xff]
    %v753 = vld [vmem:[%s5 + $0x88] sm:$0xf]
    %v754 = vld [vmem:[%s5 + $0x8c] sm:$0xff]
    %v755 = vld [vmem:[%s5 + $0x94] sm:$0xff]
    %v756 = vld [vmem:[%s5 + $0x9c] sm:$0xff]
    %v757 = vld [vmem:[%s5 + $0xa4] sm:$0xf]
    %v758 = vld [vmem:[%s5 + $0xa8] sm:$0xff]
    %v759 = vld [vmem:[%s5 + $0xb0] sm:$0xff]
    %v760 = vld [vmem:[%s5 + $0xb8] sm:$0xff]
    %v761 = vld [vmem:[%s5 + $0xc0] sm:$0xf]
    %v762 = vld [vmem:[%s5 + $0xc4] sm:$0xff]
    %v763 = vld [vmem:[%s5 + $0xcc] sm:$0xff]
    %v764 = vld [vmem:[%s5 + $0xd4] sm:$0xff]
    %v765 = vld [vmem:[%s5 + $0xdc] sm:$0xf]
    %v766 = vld [vmem:[%s5 + $0xe0] sm:$0xff]
    %v767 = vld [vmem:[%s5 + $0xe8] sm:$0xff]
    %v768 = vld [vmem:[%s5 + $0xf0] sm:$0xff]
    %v769 = vld [vmem:[%s5 + $0xf8] sm:$0xf]
    %v770 = vld [vmem:[%s5 + $0xfc] sm:$0xff]
    %v771 = vld [vmem:[%s5 + $0x104] sm:$0xff]
    %v772 = vld [vmem:[%s5 + $0x10c] sm:$0xff]
    %v773 = vld [vmem:[%s5 + $0x114] sm:$0xf]
    %v774 = vld [vmem:[%s5 + $0x118] sm:$0xff]
    %v775 = vld [vmem:[%s5 + $0x120] sm:$0xff]
    %v776 = vld [vmem:[%s5 + $0x128] sm:$0xff]
    %v777 = vld [vmem:[%s5 + $0x130] sm:$0xf]
    %v778 = vld [vmem:[%s5 + $0x134] sm:$0xff]
    %v779 = vld [vmem:[%s5 + $0x13c] sm:$0xff]
    %v780 = vld [vmem:[%s5 + $0x144] sm:$0xff]
    %v781 = vld [vmem:[%s5 + $0x14c] sm:$0xf]
    %v782 = vld [vmem:[%s5 + $0x150] sm:$0xff]
    %v783 = vld [vmem:[%s5 + $0x158] sm:$0xff]
    %v784 = vld [vmem:[%s5 + $0x160] sm:$0xff]
    %v785 = vld [vmem:[%s5 + $0x168] sm:$0xf]
    %v786 = vld [vmem:[%s5 + $0x16c] sm:$0xff]
    %v787 = vld [vmem:[%s5 + $0x174] sm:$0xff]
    %v788 = vld [vmem:[%s5 + $0x17c] sm:$0xff]
    %v789 = vld [vmem:[%s5 + $0x184] sm:$0xf]
    %v790 = vld [vmem:[%s5 + $0x188] sm:$0xff]
    %v791 = vld [vmem:[%s5 + $0x190] sm:$0xff]
    %v792 = vld [vmem:[%s5 + $0x198] sm:$0xff]
    %v793 = vld [vmem:[%s5 + $0x1a0] sm:$0xf]
    %v794 = vld [vmem:[%s5 + $0x1a4] sm:$0xff]
    %v795 = vld [vmem:[%s5 + $0x1ac] sm:$0xff]
    %v796 = vld [vmem:[%s5 + $0x1b4] sm:$0xff]
    %v797 = vld [vmem:[%s5 + $0x1bc] sm:$0xf]
    %v798 = vld [vmem:[%s6] sm:$0x7f]
    %v800 = vlaneseq
    %v801 = vshrl.u32 %v800, 7
    %v802 = vsub.s32 0, %v801
    %v803 = vrot.slane %v798, %v802
    %v804 = vlaneseq
    %v805 = vshrl.u32 %v804, 7
    %v806 = vsub.s32 1, %v805
    %v807 = vrot.slane %v798, %v806
    %v808 = vlaneseq
    %v809 = vshrl.u32 %v808, 7
    %v810 = vsub.s32 2, %v809
    %v811 = vrot.slane %v798, %v810
    %v812 = vlaneseq
    %v813 = vshrl.u32 %v812, 7
    %v814 = vsub.s32 3, %v813
    %v815 = vrot.slane %v798, %v814
    %v816 = vlaneseq
    %v817 = vshrl.u32 %v816, 7
    %v818 = vsub.s32 4, %v817
    %v819 = vrot.slane %v798, %v818
    %v820 = vlaneseq
    %v821 = vshrl.u32 %v820, 7
    %v822 = vsub.s32 5, %v821
    %v823 = vrot.slane %v798, %v822
    %v824 = vlaneseq
    %v825 = vshrl.u32 %v824, 7
    %v826 = vsub.s32 6, %v825
    %v827 = vrot.slane %v798, %v826
    %v899 = vunpack.c.l.b16 %v734
    %v900 = vunpack.c.h.b16 %v734
    %v901 = vunpack.c.l.b16 %v735
    %v902 = vunpack.c.h.b16 %v735
    %v903 = vunpack.c.l.b16 %v736
    %v904 = vunpack.c.h.b16 %v736
    %v905 = vunpack.c.l.b16 %v737
    %v906 = vunpack.c.l.b16 %v738
    %v907 = vunpack.c.h.b16 %v738
    %v908 = vunpack.c.l.b16 %v739
    %v909 = vunpack.c.h.b16 %v739
    %v910 = vunpack.c.l.b16 %v740
    %v911 = vunpack.c.h.b16 %v740
    %v912 = vunpack.c.l.b16 %v741
    %v913 = vunpack.c.l.b16 %v742
    %v914 = vunpack.c.h.b16 %v742
    %v915 = vunpack.c.l.b16 %v743
    %v916 = vunpack.c.h.b16 %v743
    %v917 = vunpack.c.l.b16 %v744
    %v918 = vunpack.c.h.b16 %v744
    %v919 = vunpack.c.l.b16 %v745
    %v920 = vunpack.c.l.b16 %v746
    %v921 = vunpack.c.h.b16 %v746
    %v922 = vunpack.c.l.b16 %v747
    %v923 = vunpack.c.h.b16 %v747
    %v924 = vunpack.c.l.b16 %v748
    %v925 = vunpack.c.h.b16 %v748
    %v926 = vunpack.c.l.b16 %v749
    %v927 = vunpack.c.l.b16 %v750
    %v928 = vunpack.c.h.b16 %v750
    %v929 = vunpack.c.l.b16 %v751
    %v930 = vunpack.c.h.b16 %v751
    %v931 = vunpack.c.l.b16 %v752
    %v932 = vunpack.c.h.b16 %v752
    %v933 = vunpack.c.l.b16 %v753
    %v934 = vunpack.c.l.b16 %v754
    %v935 = vunpack.c.h.b16 %v754
    %v936 = vunpack.c.l.b16 %v755
    %v937 = vunpack.c.h.b16 %v755
    %v938 = vunpack.c.l.b16 %v756
    %v939 = vunpack.c.h.b16 %v756
    %v940 = vunpack.c.l.b16 %v757
    %v941 = vunpack.c.l.b16 %v758
    %v942 = vunpack.c.h.b16 %v758
    %v943 = vunpack.c.l.b16 %v759
    %v944 = vunpack.c.h.b16 %v759
    %v945 = vunpack.c.l.b16 %v760
    %v946 = vunpack.c.h.b16 %v760
    %v947 = vunpack.c.l.b16 %v761
    %v948 = vunpack.c.l.b16 %v762
    %v949 = vunpack.c.h.b16 %v762
    %v950 = vunpack.c.l.b16 %v763
    %v951 = vunpack.c.h.b16 %v763
    %v952 = vunpack.c.l.b16 %v764
    %v953 = vunpack.c.h.b16 %v764
    %v954 = vunpack.c.l.b16 %v765
    %v955 = vunpack.c.l.b16 %v766
    %v956 = vunpack.c.h.b16 %v766
    %v957 = vunpack.c.l.b16 %v767
    %v958 = vunpack.c.h.b16 %v767
    %v959 = vunpack.c.l.b16 %v768
    %v960 = vunpack.c.h.b16 %v768
    %v961 = vunpack.c.l.b16 %v769
    %v962 = vunpack.c.l.b16 %v770
    %v963 = vunpack.c.h.b16 %v770
    %v964 = vunpack.c.l.b16 %v771
    %v965 = vunpack.c.h.b16 %v771
    %v966 = vunpack.c.l.b16 %v772
    %v967 = vunpack.c.h.b16 %v772
    %v968 = vunpack.c.l.b16 %v773
    %v969 = vunpack.c.l.b16 %v774
    %v970 = vunpack.c.h.b16 %v774
    %v971 = vunpack.c.l.b16 %v775
    %v972 = vunpack.c.h.b16 %v775
    %v973 = vunpack.c.l.b16 %v776
    %v974 = vunpack.c.h.b16 %v776
    %v975 = vunpack.c.l.b16 %v777
    %v976 = vunpack.c.l.b16 %v778
    %v977 = vunpack.c.h.b16 %v778
    %v978 = vunpack.c.l.b16 %v779
    %v979 = vunpack.c.h.b16 %v779
    %v980 = vunpack.c.l.b16 %v780
    %v981 = vunpack.c.h.b16 %v780
    %v982 = vunpack.c.l.b16 %v781
    %v983 = vunpack.c.l.b16 %v782
    %v984 = vunpack.c.h.b16 %v782
    %v985 = vunpack.c.l.b16 %v783
    %v986 = vunpack.c.h.b16 %v783
    %v987 = vunpack.c.l.b16 %v784
    %v988 = vunpack.c.h.b16 %v784
    %v989 = vunpack.c.l.b16 %v785
    %v990 = vunpack.c.l.b16 %v786
    %v991 = vunpack.c.h.b16 %v786
    %v992 = vunpack.c.l.b16 %v787
    %v993 = vunpack.c.h.b16 %v787
    %v994 = vunpack.c.l.b16 %v788
    %v995 = vunpack.c.h.b16 %v788
    %v996 = vunpack.c.l.b16 %v789
    %v997 = vunpack.c.l.b16 %v790
    %v998 = vunpack.c.h.b16 %v790
    %v999 = vunpack.c.l.b16 %v791
    %v1000 = vunpack.c.h.b16 %v791
    %v1001 = vunpack.c.l.b16 %v792
    %v1002 = vunpack.c.h.b16 %v792
    %v1003 = vunpack.c.l.b16 %v793
    %v1004 = vunpack.c.l.b16 %v794
    %v1005 = vunpack.c.h.b16 %v794
    %v1006 = vunpack.c.l.b16 %v795
    %v1007 = vunpack.c.h.b16 %v795
    %v1008 = vunpack.c.l.b16 %v796
    %v1009 = vunpack.c.h.b16 %v796
    %v1010 = vunpack.c.l.b16 %v797
    %v1011 = vpack.c.b16 %v906, %v899
    %v1012 = vpack.c.b16 %v907, %v900
    %v1013 = vpack.c.b16 %v908, %v901
    %v1014 = vpack.c.b16 %v909, %v902
    %v1015 = vpack.c.b16 %v910, %v903
    %v1016 = vpack.c.b16 %v911, %v904
    %v1017 = vpack.c.b16 %v912, %v905
    %v1018 = vpack.c.b16 %v920, %v913
    %v1019 = vpack.c.b16 %v921, %v914
    %v1020 = vpack.c.b16 %v922, %v915
    %v1021 = vpack.c.b16 %v923, %v916
    %v1022 = vpack.c.b16 %v924, %v917
    %v1023 = vpack.c.b16 %v925, %v918
    %v1024 = vpack.c.b16 %v926, %v919
    %v1025 = vpack.c.b16 %v934, %v927
    %v1026 = vpack.c.b16 %v935, %v928
    %v1027 = vpack.c.b16 %v936, %v929
    %v1028 = vpack.c.b16 %v937, %v930
    %v1029 = vpack.c.b16 %v938, %v931
    %v1030 = vpack.c.b16 %v939, %v932
    %v1031 = vpack.c.b16 %v940, %v933
    %v1032 = vpack.c.b16 %v948, %v941
    %v1033 = vpack.c.b16 %v949, %v942
    %v1034 = vpack.c.b16 %v950, %v943
    %v1035 = vpack.c.b16 %v951, %v944
    %v1036 = vpack.c.b16 %v952, %v945
    %v1037 = vpack.c.b16 %v953, %v946
    %v1038 = vpack.c.b16 %v954, %v947
    %v1039 = vpack.c.b16 %v962, %v955
    %v1040 = vpack.c.b16 %v963, %v956
    %v1041 = vpack.c.b16 %v964, %v957
    %v1042 = vpack.c.b16 %v965, %v958
    %v1043 = vpack.c.b16 %v966, %v959
    %v1044 = vpack.c.b16 %v967, %v960
    %v1045 = vpack.c.b16 %v968, %v961
    %v1046 = vpack.c.b16 %v976, %v969
    %v1047 = vpack.c.b16 %v977, %v970
    %v1048 = vpack.c.b16 %v978, %v971
    %v1049 = vpack.c.b16 %v979, %v972
    %v1050 = vpack.c.b16 %v980, %v973
    %v1051 = vpack.c.b16 %v981, %v974
    %v1052 = vpack.c.b16 %v982, %v975
    %v1053 = vpack.c.b16 %v990, %v983
    %v1054 = vpack.c.b16 %v991, %v984
    %v1055 = vpack.c.b16 %v992, %v985
    %v1056 = vpack.c.b16 %v993, %v986
    %v1057 = vpack.c.b16 %v994, %v987
    %v1058 = vpack.c.b16 %v995, %v988
    %v1059 = vpack.c.b16 %v996, %v989
    %v1060 = vpack.c.b16 %v1004, %v997
    %v1061 = vpack.c.b16 %v1005, %v998
    %v1062 = vpack.c.b16 %v1006, %v999
    %v1063 = vpack.c.b16 %v1007, %v1000
    %v1064 = vpack.c.b16 %v1008, %v1001
    %v1065 = vpack.c.b16 %v1009, %v1002
    %v1066 = vpack.c.b16 %v1010, %v1003
    %1123 = vmatprep.subr.bf16.mxu0 %v1012
    %1124 = vmatpush1.bf16.msra.mxu0 %v1011
    %1125 = vmatprep.subr.bf16.mxu0 %v1019
    %1126 = vmatpush1.bf16.msra.mxu0 %v1018
    %1127 = vmatprep.subr.bf16.mxu0 %v1026
    %1128 = vmatpush1.bf16.msra.mxu0 %v1025
    %1129 = vmatprep.subr.bf16.mxu0 %v1033
    %1130 = vmatpush1.bf16.msra.mxu0 %v1032
    %1131 = vmatprep.subr.bf16.mxu0 %v1040
    %1132 = vmatpush1.bf16.msra.mxu0 %v1039
    %1133 = vmatprep.subr.bf16.mxu0 %v1047
    %1134 = vmatpush1.bf16.msra.mxu0 %v1046
    %1135 = vmatprep.subr.bf16.mxu0 %v1054
    %1136 = vmatpush1.bf16.msra.mxu0 %v1053
    %1137 = vmatprep.subr.bf16.mxu0 %v1061
    %1138 = vmatpush1.bf16.msra.mxu0 %v1060
    %1139 = vmatprep.subr.bf16.mxu0 0
    %1140 = vmatpush1.bf16.msra.mxu0 0
    %1141 = vmatprep.subr.bf16.mxu0 0
    %1142 = vmatpush1.bf16.msra.mxu0 0
    %1143 = vmatprep.subr.bf16.mxu0 0
    %1144 = vmatpush1.bf16.msra.mxu0 0
    %1145 = vmatprep.subr.bf16.mxu0 0
    %1146 = vmatpush1.bf16.msra.mxu0 0
    %1147 = vmatprep.subr.bf16.mxu0 0
    %1148 = vmatpush1.bf16.msra.mxu0 0
    %1149 = vmatprep.subr.bf16.mxu0 0
    %1150 = vmatpush1.bf16.msra.mxu0 0
    %1151 = vmatprep.subr.bf16.mxu0 0
    %1152 = vmatpush1.bf16.msra.mxu0 0
    %1153 = vmatprep.subr.bf16.mxu0 0
    %1154 = vmatpush1.bf16.msra.mxu0 0
    %1155 = vmatprep.mubr.bf16.mxu0 0
    %1156 = vmatmul.mubr.bf16.gmra.mrb[0].mxu0 %v733
    %v1157 = vpop.f32.mrb[0].mxu0
    %v1158 = vadd.f32 %v803, %v1157
    %v1159 = vpop.f32.mrb[0].mxu0
    %v1160 = vadd.f32 %v807, %v1159
    %v1161 = vpop.f32.mrb[0].mxu0
    %v1162 = vpop.f32.mrb[0].mxu0
    %1163 = vdwg.mxu0
    %1164 = vmatprep.subr.bf16.mxu0 %v1014
    %1165 = vmatpush1.bf16.msra.mxu0 %v1013
    %1166 = vmatprep.subr.bf16.mxu0 %v1021
    %1167 = vmatpush1.bf16.msra.mxu0 %v1020
    %1168 = vmatprep.subr.bf16.mxu0 %v1028
    %1169 = vmatpush1.bf16.msra.mxu0 %v1027
    %1170 = vmatprep.subr.bf16.mxu0 %v1035
    %1171 = vmatpush1.bf16.msra.mxu0 %v1034
    %1172 = vmatprep.subr.bf16.mxu0 %v1042
    %1173 = vmatpush1.bf16.msra.mxu0 %v1041
    %1174 = vmatprep.subr.bf16.mxu0 %v1049
    %1175 = vmatpush1.bf16.msra.mxu0 %v1048
    %1176 = vmatprep.subr.bf16.mxu0 %v1056
    %1177 = vmatpush1.bf16.msra.mxu0 %v1055
    %1178 = vmatprep.subr.bf16.mxu0 %v1063
    %1179 = vmatpush1.bf16.msra.mxu0 %v1062
    %1180 = vmatprep.subr.bf16.mxu0 0
    %1181 = vmatpush1.bf16.msra.mxu0 0
    %1182 = vmatprep.subr.bf16.mxu0 0
    %1183 = vmatpush1.bf16.msra.mxu0 0
    %1184 = vmatprep.subr.bf16.mxu0 0
    %1185 = vmatpush1.bf16.msra.mxu0 0
    %1186 = vmatprep.subr.bf16.mxu0 0
    %1187 = vmatpush1.bf16.msra.mxu0 0
    %1188 = vmatprep.subr.bf16.mxu0 0
    %1189 = vmatpush1.bf16.msra.mxu0 0
    %1190 = vmatprep.subr.bf16.mxu0 0
    %1191 = vmatpush1.bf16.msra.mxu0 0
    %1192 = vmatprep.subr.bf16.mxu0 0
    %1193 = vmatpush1.bf16.msra.mxu0 0
    %1194 = vmatprep.subr.bf16.mxu0 0
    %1195 = vmatpush1.bf16.msra.mxu0 0
    %1196 = vmatprep.mubr.bf16.mxu0 0
    %1197 = vmatmul.mubr.bf16.gmra.mrb[0].mxu0 %v733
    %v1198 = vpop.f32.mrb[0].mxu0
    %v1199 = vadd.f32 %v811, %v1198
    %v1200 = vpop.f32.mrb[0].mxu0
    %v1201 = vadd.f32 %v815, %v1200
    %v1202 = vpop.f32.mrb[0].mxu0
    %v1203 = vpop.f32.mrb[0].mxu0
    %1204 = vdwg.mxu0
    %1205 = vmatprep.subr.bf16.mxu0 %v1016
    %1206 = vmatpush1.bf16.msra.mxu0 %v1015
    %1207 = vmatprep.subr.bf16.mxu0 %v1023
    %1208 = vmatpush1.bf16.msra.mxu0 %v1022
    %1209 = vmatprep.subr.bf16.mxu0 %v1030
    %1210 = vmatpush1.bf16.msra.mxu0 %v1029
    %1211 = vmatprep.subr.bf16.mxu0 %v1037
    %1212 = vmatpush1.bf16.msra.mxu0 %v1036
    %1213 = vmatprep.subr.bf16.mxu0 %v1044
    %1214 = vmatpush1.bf16.msra.mxu0 %v1043
    %1215 = vmatprep.subr.bf16.mxu0 %v1051
    %1216 = vmatpush1.bf16.msra.mxu0 %v1050
    %1217 = vmatprep.subr.bf16.mxu0 %v1058
    %1218 = vmatpush1.bf16.msra.mxu0 %v1057
    %1219 = vmatprep.subr.bf16.mxu0 %v1065
    %1220 = vmatpush1.bf16.msra.mxu0 %v1064
    %1221 = vmatprep.subr.bf16.mxu0 0
    %1222 = vmatpush1.bf16.msra.mxu0 0
    %1223 = vmatprep.subr.bf16.mxu0 0
    %1224 = vmatpush1.bf16.msra.mxu0 0
    %1225 = vmatprep.subr.bf16.mxu0 0
    %1226 = vmatpush1.bf16.msra.mxu0 0
    %1227 = vmatprep.subr.bf16.mxu0 0
    %1228 = vmatpush1.bf16.msra.mxu0 0
    %1229 = vmatprep.subr.bf16.mxu0 0
    %1230 = vmatpush1.bf16.msra.mxu0 0
    %1231 = vmatprep.subr.bf16.mxu0 0
    %1232 = vmatpush1.bf16.msra.mxu0 0
    %1233 = vmatprep.subr.bf16.mxu0 0
    %1234 = vmatpush1.bf16.msra.mxu0 0
    %1235 = vmatprep.subr.bf16.mxu0 0
    %1236 = vmatpush1.bf16.msra.mxu0 0
    %1237 = vmatprep.mubr.bf16.mxu0 0
    %1238 = vmatmul.mubr.bf16.gmra.mrb[0].mxu0 %v733
    %v1239 = vpop.f32.mrb[0].mxu0
    %v1240 = vadd.f32 %v819, %v1239
    %v1241 = vpop.f32.mrb[0].mxu0
    %v1242 = vadd.f32 %v823, %v1241
    %v1243 = vpop.f32.mrb[0].mxu0
    %v1244 = vpop.f32.mrb[0].mxu0
    %1245 = vdwg.mxu0
    %1246 = vmatprep.subr.bf16.mxu0 0
    %1247 = vmatpush1.bf16.msra.mxu0 %v1017
    %1248 = vmatprep.subr.bf16.mxu0 0
    %1249 = vmatpush1.bf16.msra.mxu0 %v1024
    %1250 = vmatprep.subr.bf16.mxu0 0
    %1251 = vmatpush1.bf16.msra.mxu0 %v1031
    %1252 = vmatprep.subr.bf16.mxu0 0
    %1253 = vmatpush1.bf16.msra.mxu0 %v1038
    %1254 = vmatprep.subr.bf16.mxu0 0
    %1255 = vmatpush1.bf16.msra.mxu0 %v1045
    %1256 = vmatprep.subr.bf16.mxu0 0
    %1257 = vmatpush1.bf16.msra.mxu0 %v1052
    %1258 = vmatprep.subr.bf16.mxu0 0
    %1259 = vmatpush1.bf16.msra.mxu0 %v1059
    %1260 = vmatprep.subr.bf16.mxu0 0
    %1261 = vmatpush1.bf16.msra.mxu0 %v1066
    %1262 = vmatprep.subr.bf16.mxu0 0
    %1263 = vmatpush1.bf16.msra.mxu0 0
    %1264 = vmatprep.subr.bf16.mxu0 0
    %1265 = vmatpush1.bf16.msra.mxu0 0
    %1266 = vmatprep.subr.bf16.mxu0 0
    %1267 = vmatpush1.bf16.msra.mxu0 0
    %1268 = vmatprep.subr.bf16.mxu0 0
    %1269 = vmatpush1.bf16.msra.mxu0 0
    %1270 = vmatprep.subr.bf16.mxu0 0
    %1271 = vmatpush1.bf16.msra.mxu0 0
    %1272 = vmatprep.subr.bf16.mxu0 0
    %1273 = vmatpush1.bf16.msra.mxu0 0
    %1274 = vmatprep.subr.bf16.mxu0 0
    %1275 = vmatpush1.bf16.msra.mxu0 0
    %1276 = vmatprep.subr.bf16.mxu0 0
    %1277 = vmatpush1.bf16.msra.mxu0 0
    %1278 = vmatprep.mubr.bf16.mxu0 0
    %1279 = vmatmul.mubr.bf16.gmra.mrb[0].mxu0 %v733
    %v1280 = vpop.f32.mrb[0].mxu0
    %v1281 = vadd.f32 %v827, %v1280
    %v1282 = vpop.f32.mrb[0].mxu0
    %v1283 = vpop.f32.mrb[0].mxu0
    %v1284 = vpop.f32.mrb[0].mxu0
    %1285 = vdwg.mxu0
    %v1286 = vpack.c.bf16 %v1158, %v1158
    %v1287 = vpack.c.bf16 %v1160, %v1160
    %v1288 = vpack.c.bf16 %v1199, %v1199
    %v1289 = vpack.c.bf16 %v1201, %v1201
    %v1290 = vpack.c.bf16 %v1240, %v1240
    %v1291 = vpack.c.bf16 %v1242, %v1242
    %v1292 = vpack.c.bf16 %v1281, %v1281
    %v1300 = vunpack.c.l.b16 %v1286
    %v1301 = vunpack.c.l.b16 %v1287
    %v1302 = vunpack.c.l.b16 %v1288
    %v1303 = vunpack.c.l.b16 %v1289
    %v1304 = vunpack.c.l.b16 %v1290
    %v1305 = vunpack.c.l.b16 %v1291
    %v1306 = vunpack.c.l.b16 %v1292
    %v1307 = vpack.c.b16 %v1301, %v1300
    %v1308 = vpack.c.b16 %v1303, %v1302
    %v1309 = vpack.c.b16 %v1305, %v1304
    %v1310 = vpack.c.b16 %v1306, %v1306
    %1315 = vst [vmem:[#allocation2] sm:$0xff] %v1307
    %1316 = vst [vmem:[#allocation2 + $0x8] sm:$0xff] %v1308
    %1317 = vst [vmem:[#allocation2 + $0x10] sm:$0xff] %v1309
    %vm1318 = vcmask 125952
    %1319 = vst.msk [vmem:[#allocation2 + $0x18] sm:$0xf] %vm1318, %v1310
    // Predicated region
    $region30: #{tpu_custom_call.1} parent=1 // pred_check
      _
    $region31: #{tpu_custom_call.1} parent=1 // pred_check_branch
      %1321 = sbr.rel (0) target = $region33
    $region32: #{tpu_custom_call.1} parent=1 // pred_region
      %s1323 = ssub.s32 448, 448
      %1324 = vsyncadd [#allocation3], %s1323
      %s1326 = sshll.u32 [#allocation2], 4
      %s1327 = int_to_ptr.vmem [resolvable:$true] %s1326
      %1329 = dma.vmem_to_hbm [thread:$0]  %s1327, 448, %s7, [#allocation3]
    $region33: #{tpu_custom_call.1} parent=1 // pred_fallthru
      _
    // Predicated region
    $region34: #{tpu_custom_call.1} parent=1 // pred_check
      _
    $region35: #{tpu_custom_call.1} parent=1 // pred_check_branch
      %1331 = sbr.rel (0) target = $region37
    $region36: #{tpu_custom_call.1} parent=1 // pred_region
      %1332 = dma.done [#allocation3], 448
    $region37: #{tpu_custom_call.1} parent=1 // pred_fallthru
      _
    %1333 = vsyncpa [#allocation3], 1

</llo_original>
